<compile_context>
chip_gen: v5e
topology: v5e:2x2
jax: 0.10.0
libtpu: 0.0.40
codegen_flags: <defaults>
</compile_context>

<pallas_src>
import math
from functools import partial

import jax
import jax.numpy as jnp
from jax.experimental import pallas as pl
from jax.experimental.pallas import tpu as pltpu

_MiB = 1024 * 1024


def _round_up(x, m):
    return (x + m - 1) // m * m


def _vmem_capacity_bytes():
    try:
        cap = getattr(pltpu.get_tpu_info(), "vmem_capacity_bytes", None)
        if cap:
            return int(cap)
    except Exception:
        pass
    return 64 * _MiB  # conservative default (v7x)


def _pick_tn(n_pad, prefer_split):
    cands = (512, 384, 256, 128)
    if prefer_split:
        # >=2 N blocks so both v7x TensorCores have work (harmless on 1-TC chips).
        for c in cands:
            if n_pad % c == 0 and n_pad // c >= 2:
                return c
    for c in cands:
        if n_pad % c == 0:
            return c
    return n_pad


def _pick_tk(k_pad, fits):
    # Largest 128-multiple divisor of K_pad whose VMEM footprint fits the budget.
    n128 = k_pad // 128
    for d in range(n128, 0, -1):
        if n128 % d == 0 and fits(d * 128):
            return d * 128
    return 128


def _footprint(tm, tk, tn, out_bytes, with_acc):
    buf = 2 * tm * tk * 4            # x tile, f32, double-buffered
    buf += 2 * tk * tn * 2           # w tile, bf16, double-buffered
    buf += 2 * tm * tn * out_bytes   # out tile, double-buffered
    buf += 2 * tn * 4                # bias tile
    if with_acc:
        buf += tm * tn * 4           # f32 accumulator scratch
    return buf


# ----------------------------- kernels ------------------------------------ #

def _linear_kernel_fused_k(x_ref, w_ref, b_ref, o_ref):
    # Whole K resident in VMEM: cast x->bf16 on the VPU, one MXU shot, f32 bias add.
    x_bf = x_ref[...].astype(jnp.bfloat16)
    o_ref[...] = (
        jnp.dot(x_bf, w_ref[...], preferred_element_type=jnp.float32) + b_ref[...]
    ).astype(o_ref.dtype)


def _linear_kernel_reduce_k_f32out(x_ref, w_ref, b_ref, o_ref):
    # Grid: (M, N, K); K last ("arbitrary"). f32 output: accumulate directly into o_ref.
    @pl.when(pl.program_id(2) == 0)
    def _():
        o_ref[...] = jnp.broadcast_to(b_ref[...], o_ref.shape)

    o_ref[...] += jnp.dot(
        x_ref[...].astype(jnp.bfloat16), w_ref[...],
        preferred_element_type=jnp.float32,
    )


def _linear_kernel_reduce_k_acc(x_ref, w_ref, b_ref, o_ref, acc_ref):
    # Grid: (M, N, K); K last ("arbitrary"). Non-f32 output: f32 scratch accumulator.
    @pl.when(pl.program_id(2) == 0)
    def _():
        acc_ref[...] = jnp.broadcast_to(b_ref[...], acc_ref.shape)

    acc_ref[...] += jnp.dot(
        x_ref[...].astype(jnp.bfloat16), w_ref[...],
        preferred_element_type=jnp.float32,
    )

    @pl.when(pl.program_id(2) == pl.num_programs(2) - 1)
    def _():
        o_ref[...] = acc_ref[...].astype(o_ref.dtype)


# ----------------------------- wrapper ------------------------------------ #

def prepare_llm_resize_params(weight, bias):
    """One-time (model-load) preprocessing of nn.Linear parameters.

    weight : (N, K)  PyTorch layout (out_features, in_features)
    bias   : (N,)
    Returns (w_bf16 padded (K_pad, N_pad), bias_f32 padded (1, N_pad), N).
    """
    N, K = weight.shape
    K_pad = _round_up(K, 128)
    N_pad = _round_up(N, 128)
    w_bf = jnp.asarray(weight).T.astype(jnp.bfloat16)          # (K, N)
    if (K_pad, N_pad) != (K, N):
        w_bf = jnp.pad(w_bf, ((0, K_pad - K), (0, N_pad - N)))
    b_f32 = jnp.asarray(bias).astype(jnp.float32).reshape(1, N)
    if N_pad != N:
        b_f32 = jnp.pad(b_f32, ((0, 0), (0, N_pad - N)))
    return w_bf, b_f32, N


@partial(jax.jit, static_argnames=("n_out",))
def llm_resize_forward(x, w_bf, b_f32, n_out):
    """out = x @ W^T + b over the last dim of x (nn.Linear forward).

    x    : (..., K)      activations (any float dtype; matmul runs in bf16)
    w_bf : (K_pad, N_pad) pre-cast / pre-padded bf16 weight (from prepare_*)
    b_f32: (1, N_pad)     pre-padded f32 bias
    n_out: int            original out_features N (static)
    """
    *lead, K = x.shape
    K_pad, N_pad = w_bf.shape
    M = math.prod(lead) if lead else 1

    out_dtype = x.dtype
    out_bytes = jnp.dtype(out_dtype).itemsize

    # Tile plan (Python ints at trace time).
    tm = min(256, _round_up(max(M, 1), 16))     # 16: bf16 sublane packing
    M_pad = _round_up(M, tm)
    prefer_split = (M_pad // tm == 1)
    tn = _pick_tn(N_pad, prefer_split)

    vmem_cap = _vmem_capacity_bytes()
    tile_budget = max(32 * _MiB, vmem_cap - 24 * _MiB)
    vmem_ceiling = vmem_cap - 8 * _MiB

    # Activation: reshape + zero-pad only (no cast — cast happens in-kernel).
    x2d = x.reshape(M, K)
    if (M_pad, K_pad) != (M, K):
        x2d = jnp.pad(x2d, ((0, M_pad - M), (0, K_pad - K)))

    cost = pl.CostEstimate(
        flops=2 * M_pad * N_pad * K_pad,
        bytes_accessed=M_pad * K_pad * 4 + K_pad * N_pad * 2
        + M_pad * N_pad * out_bytes,
        transcendentals=0,
    )

    m_blocks = M_pad // tm
    n_blocks = N_pad // tn

    if _footprint(tm, K_pad, tn, out_bytes, with_acc=False) <= tile_budget:
        # ---- Fused-K fast path: whole K resident, single MXU shot per tile. ----
        x_stream = M_pad * K_pad * 4
        w_stream = K_pad * N_pad * 2
        # Keep the operand that would otherwise be re-streamed more resident
        # across the inner grid axis (its block index stays constant -> DMA deduped).
        weight_resident = w_stream * (m_blocks - 1) >= x_stream * (n_blocks - 1)

        if weight_resident:
            grid = (n_blocks, m_blocks)                       # W constant over inner M loop
            x_spec = pl.BlockSpec((tm, K_pad), lambda j, i: (i, 0))
            w_spec = pl.BlockSpec((K_pad, tn), lambda j, i: (0, j))
            b_spec = pl.BlockSpec((1, tn), lambda j, i: (0, j))
            o_spec = pl.BlockSpec((tm, tn), lambda j, i: (i, j))
        else:
            grid = (m_blocks, n_blocks)                       # x constant over inner N loop
            x_spec = pl.BlockSpec((tm, K_pad), lambda i, j: (i, 0))
            w_spec = pl.BlockSpec((K_pad, tn), lambda i, j: (0, j))
            b_spec = pl.BlockSpec((1, tn), lambda i, j: (0, j))
            o_spec = pl.BlockSpec((tm, tn), lambda i, j: (i, j))

        vmem_limit = int(min(
            max(_footprint(tm, K_pad, tn, out_bytes, False) + 8 * _MiB, 32 * _MiB),
            vmem_ceiling))

        out2d = pl.pallas_call(
            _linear_kernel_fused_k,
            out_shape=jax.ShapeDtypeStruct((M_pad, N_pad), out_dtype),
            grid_spec=pltpu.PrefetchScalarGridSpec(
                num_scalar_prefetch=0,
                grid=grid,
                in_specs=[x_spec, w_spec, b_spec],
                out_specs=o_spec,
            ),
            compiler_params=pltpu.CompilerParams(
                dimension_semantics=("parallel", "parallel"),
                vmem_limit_bytes=vmem_limit,
            ),
            cost_estimate=cost,
        )(x2d, w_bf, b_f32)
    else:
        # ---- Reduction fallback: K tiled, K-last grid axis. ----
        f32_out = out_dtype == jnp.float32
        with_acc = not f32_out

        def fits(tk):
            return _footprint(tm, tk, tn, out_bytes, with_acc) <= tile_budget

        tk = _pick_tk(K_pad, fits)          # divides K_pad, so no extra weight padding
        grid = (m_blocks, n_blocks, K_pad // tk)
        vmem_limit = int(min(
            max(_footprint(tm, tk, tn, out_bytes, with_acc) + 8 * _MiB, 32 * _MiB),
            vmem_ceiling))

        kernel = _linear_kernel_reduce_k_f32out if f32_out else _linear_kernel_reduce_k_acc
        scratch = [] if f32_out else [pltpu.VMEM((tm, tn), jnp.float32)]

        out2d = pl.pallas_call(
            kernel,
            out_shape=jax.ShapeDtypeStruct((M_pad, N_pad), out_dtype),
            grid_spec=pltpu.PrefetchScalarGridSpec(
                num_scalar_prefetch=0,
                grid=grid,
                in_specs=[
                    pl.BlockSpec((tm, tk), lambda i, j, k: (i, k)),   # x tile
                    pl.BlockSpec((tk, tn), lambda i, j, k: (k, j)),   # w tile
                    pl.BlockSpec((1, tn), lambda i, j, k: (0, j)),    # bias tile
                ],
                out_specs=pl.BlockSpec((tm, tn), lambda i, j, k: (i, j)),
                scratch_shapes=scratch,
            ),
            compiler_params=pltpu.CompilerParams(
                dimension_semantics=("parallel", "parallel", "arbitrary"),
                vmem_limit_bytes=vmem_limit,
            ),
            cost_estimate=cost,
        )(x2d, w_bf, b_f32)

    out2d = out2d[:M, :n_out]
    return out2d.reshape(*lead, n_out)


if __name__ == "__main__":
    # Small shapes consistent with the module forward: x: (batch, seq, llm_size).
    batch, seq = 2, 8
    llm_size, sd_text_size = 256, 128

    key = jax.random.PRNGKey(0)
    kx, kw, kb = jax.random.split(key, 3)

    # Deterministic init mimicking nn.Linear's uniform(-1/sqrt(K), 1/sqrt(K)).
    bound = 1.0 / (llm_size ** 0.5)
    weight = jax.random.uniform(
        kw, (sd_text_size, llm_size), jnp.float32, minval=-bound, maxval=bound
    )  # PyTorch layout (out_features, in_features)
    bias = jax.random.uniform(
        kb, (sd_text_size,), jnp.float32, minval=-bound, maxval=bound
    )
    x = jax.random.normal(kx, (batch, seq, llm_size), jnp.float32)

    # One-time parameter preprocessing (hoisted out of the per-call path).
    w_bf, b_f32, n_out = prepare_llm_resize_params(weight, bias)

    out = llm_resize_forward(x, w_bf, b_f32, n_out)
    out = jax.block_until_ready(out)

    # Reference: kernel runs the matmul in bf16 (f32 accumulate), so compare
    # against the same bf16-rounded operands.
    x_bf16 = x.astype(jnp.bfloat16).astype(jnp.float32)
    w_bf16 = weight.T.astype(jnp.bfloat16).astype(jnp.float32)
    ref = x_bf16 @ w_bf16 + bias

    assert out.shape == (batch, seq, sd_text_size)
    assert jnp.allclose(out.astype(jnp.float32), ref, atol=2e-3, rtol=2e-3)

    print("KERNEL_OK")
</pallas_src>

<mosaic_0001>
module attributes {stable_mosaic.version = 11 : i64} {
  func.func @_linear_kernel_fused_k(%arg0: i32, %arg1: i32, %arg2: memref<16x256xf32, #tpu.memory_space<vmem>>, %arg3: memref<256x128xbf16, #tpu.memory_space<vmem>>, %arg4: memref<1x128xf32, #tpu.memory_space<vmem>>, %arg5: memref<16x128xf32, #tpu.memory_space<vmem>>) attributes {dimension_semantics = [#tpu.dimension_semantics<parallel>, #tpu.dimension_semantics<parallel>], iteration_bounds = array<i64: 1, 1>, scalar_prefetch = 0 : i64, scratch_operands = 0 : i64, tpu.core_type = #tpu.core_type<tc>, window_params = [{transform_indices = @transform_0, window_bounds = array<i64: 16, 256>}, {transform_indices = @transform_1, window_bounds = array<i64: 256, 128>}, {transform_indices = @transform_2, window_bounds = array<i64: 1, 128>}, {transform_indices = @transform_3, window_bounds = array<i64: 16, 128>}]} {
    %c0 = arith.constant 0 : index
    %c0_0 = arith.constant 0 : index
    %0 = vector.load %arg2[%c0, %c0_0] : memref<16x256xf32, #tpu.memory_space<vmem>>, vector<16x256xf32>
    %1 = arith.truncf %0 : vector<16x256xf32> to vector<16x256xbf16>
    %c0_1 = arith.constant 0 : index
    %c0_2 = arith.constant 0 : index
    %2 = vector.load %arg3[%c0_1, %c0_2] : memref<256x128xbf16, #tpu.memory_space<vmem>>, vector<256x128xbf16>
    %cst = arith.constant dense<0.000000e+00> : vector<16x128xf32>
    %3 = tpu.matmul %1, %2, %cst {dimension_numbers = #tpu.dot_dimension_numbers<[1], [0], [0], [1], [0, 0, 1, 1], [], []>} : vector<16x256xbf16>, vector<256x128xbf16>, vector<16x128xf32> -> vector<16x128xf32>
    %c0_3 = arith.constant 0 : index
    %c0_4 = arith.constant 0 : index
    %4 = vector.load %arg4[%c0_3, %c0_4] : memref<1x128xf32, #tpu.memory_space<vmem>>, vector<1x128xf32>
    %5 = vector.broadcast %4 : vector<1x128xf32> to vector<16x128xf32>
    %6 = arith.addf %3, %5 : vector<16x128xf32>
    %c0_5 = arith.constant 0 : index
    %c0_6 = arith.constant 0 : index
    %7 = vector.load %arg5[%c0_5, %c0_6] : memref<16x128xf32, #tpu.memory_space<vmem>>, vector<16x128xf32>
    tpu.vector_store %arg5[%c0_5, %c0_6], %6 {strides = array<i32>} : memref<16x128xf32, #tpu.memory_space<vmem>>, vector<16x128xf32>,
    return
  }
  func.func @transform_0(%arg0: i32, %arg1: i32) -> (i32, i32) {
    %c0_i32 = arith.constant 0 : i32
    %c0_i32_0 = arith.constant 0 : i32
    return %arg1, %c0_i32 : i32, i32
  }
  func.func @transform_1(%arg0: i32, %arg1: i32) -> (i32, i32) {
    %c0_i32 = arith.constant 0 : i32
    %c0_i32_0 = arith.constant 0 : i32
    return %c0_i32, %arg0 : i32, i32
  }
  func.func @transform_2(%arg0: i32, %arg1: i32) -> (i32, i32) {
    %c0_i32 = arith.constant 0 : i32
    %c0_i32_0 = arith.constant 0 : i32
    return %c0_i32, %arg0 : i32, i32
  }
  func.func @transform_3(%arg0: i32, %arg1: i32) -> (i32, i32) {
    %c0_i32 = arith.constant 0 : i32
    return %arg1, %arg0 : i32, i32
  }
}

</mosaic_0001>

<llo_original>
// kernel: llm_resize_forward.1
$region0: #{llm_resize_forward.1}
  #allocation0 [shape = 'u32[]', space=smem, size = 0x4, offset = 0x4, fixed_abs, tag = 'smem constant byte address 0x4 - core index']
  #allocation1 [shape = 'u32[72,128]{1,0:T(1,128)}', space=vmem, size = 0x9000, scoped, tag = 'internal scratch']
  %s0 = inlined_call_operand.hbm [shape: f32[16,256], index: 0, kind: input, shape index: {}]
  %s1 = inlined_call_operand.hbm [shape: bf16[256,128], index: 1, kind: input, shape index: {}]
  %s2 = inlined_call_operand.vmem [shape: f32[1,128], index: 2, kind: input, shape index: {}]
  %s3 = inlined_call_operand.hbm [shape: f32[16,128], index: 3, kind: output, shape index: {}]
  %s4 = sld [smem:[#allocation0]]
  $region30: #{llm_resize_forward.1} parent=0
    _
  %s6 = ssub.s32 1, %s4
  %s7 = scalar_select 0, %s6, %s4
  $region1: #{llm_resize_forward.1} parent=0
    #allocation2 [shape = 'u8[16384]{0}', space=vmem, size = 0x4000, scoped, tag = 'input window, operand 0, single buffered']
    #allocation3 [shape = 's32[1]{0}', space=sflag, size = 0x4, scoped, tag = 'scoped memory for llm_resize_forward.1']
    #allocation4 [shape = 's32[1]{0}', space=sflag, size = 0x4, scoped, tag = 'scoped memory for llm_resize_forward.1']
    #allocation5 [shape = 'u8[65536]{0}', space=vmem, size = 0x10000, scoped, tag = 'input window, operand 1, single buffered']
    #allocation6 [shape = 's32[1]{0}', space=sflag, size = 0x4, scoped, tag = 'scoped memory for llm_resize_forward.1']
    #allocation7 [shape = 'u8[8192]{0}', space=vmem, size = 0x2000, scoped, tag = 'output window, operand 0, single buffered']
    %8 = vsyncpa [#allocation3], 0
    %9 = vsyncpa [#allocation6], 0
    %10 = vsyncpa [#allocation4], 0
    // Predicated region
    $region2: #{llm_resize_forward.1} parent=1 // pred_check
      _
    $region3: #{llm_resize_forward.1} parent=1 // pred_check_branch
      %12 = sbr.rel (0) target = $region5
    $region4: #{llm_resize_forward.1} parent=1 // pred_region
      %14 = vsyncadd [#allocation3], 0
      %s15 = sshll.u32 %s0, 4
      %s16 = int_to_ptr.hbm [resolvable:$true] %s15
      %s17 = sshll.u32 [#allocation2], 4
      %s18 = int_to_ptr.vmem [resolvable:$true] %s17
      %23 = dma.hbm_to_vmem [thread:$0]  %s16, 512, %s18, [#allocation3], 256, 256, 16
    $region5: #{llm_resize_forward.1} parent=1 // pred_fallthru
      _
    // Predicated region
    $region6: #{llm_resize_forward.1} parent=1 // pred_check
      _
    $region7: #{llm_resize_forward.1} parent=1 // pred_check_branch
      %25 = sbr.rel (0) target = $region9
    $region8: #{llm_resize_forward.1} parent=1 // pred_region
      %27 = vsyncadd [#allocation6], 0
      %s28 = sshll.u32 %s1, 4
      %s29 = int_to_ptr.hbm [resolvable:$true] %s28
      %s30 = sshll.u32 [#allocation5], 4
      %s31 = int_to_ptr.vmem [resolvable:$true] %s30
      %36 = dma.hbm_to_vmem [thread:$0]  %s29, 2048, %s31, [#allocation6], 64, 64, 4
    $region9: #{llm_resize_forward.1} parent=1 // pred_fallthru
      _
    // Predicated region
    $region10: #{llm_resize_forward.1} parent=1 // pred_check
      _
    $region11: #{llm_resize_forward.1} parent=1 // pred_check_branch
      %38 = sbr.rel (0) target = $region13
    $region12: #{llm_resize_forward.1} parent=1 // pred_region
      _
    $region13: #{llm_resize_forward.1} parent=1 // pred_fallthru
      _
    // Predicated region
    $region14: #{llm_resize_forward.1} parent=1 // pred_check
      _
    $region15: #{llm_resize_forward.1} parent=1 // pred_check_branch
      %40 = sbr.rel (0) target = $region17
    $region16: #{llm_resize_forward.1} parent=1 // pred_region
      %42 = dma.done [#allocation3], 512
    $region17: #{llm_resize_forward.1} parent=1 // pred_fallthru
      _
    // Predicated region
    $region18: #{llm_resize_forward.1} parent=1 // pred_check
      _
    $region19: #{llm_resize_forward.1} parent=1 // pred_check_branch
      %44 = sbr.rel (0) target = $region21
    $region20: #{llm_resize_forward.1} parent=1 // pred_region
      %46 = dma.done [#allocation6], 2048
    $region21: #{llm_resize_forward.1} parent=1 // pred_fallthru
      _
    %v47 = vld [vmem:[#allocation2] sm:$0xff]
    %v48 = vld [vmem:[#allocation2 + $0x8] sm:$0xff]
    %v49 = vld [vmem:[#allocation2 + $0x10] sm:$0xff]
    %v50 = vld [vmem:[#allocation2 + $0x18] sm:$0xff]
    %v51 = vpack.c.bf16 %v49, %v47
    %v52 = vpack.c.bf16 %v50, %v48
    %v53 = vld [vmem:[#allocation5] sm:$0xf]
    %v54 = vld [vmem:[#allocation5 + $0x4] sm:$0xf]
    %v55 = vld [vmem:[#allocation5 + $0x8] sm:$0xf]
    %v56 = vld [vmem:[#allocation5 + $0xc] sm:$0xf]
    %v57 = vld [vmem:[#allocation5 + $0x10] sm:$0xf]
    %v58 = vld [vmem:[#allocation5 + $0x14] sm:$0xf]
    %v59 = vld [vmem:[#allocation5 + $0x18] sm:$0xf]
    %v60 = vld [vmem:[#allocation5 + $0x1c] sm:$0xf]
    %v61 = vld [vmem:[#allocation5 + $0x20] sm:$0xf]
    %v62 = vld [vmem:[#allocation5 + $0x24] sm:$0xf]
    %v63 = vld [vmem:[#allocation5 + $0x28] sm:$0xf]
    %v64 = vld [vmem:[#allocation5 + $0x2c] sm:$0xf]
    %v65 = vld [vmem:[#allocation5 + $0x30] sm:$0xf]
    %v66 = vld [vmem:[#allocation5 + $0x34] sm:$0xf]
    %v67 = vld [vmem:[#allocation5 + $0x38] sm:$0xf]
    %v68 = vld [vmem:[#allocation5 + $0x3c] sm:$0xf]
    %v69 = vld [vmem:[#allocation5 + $0x40] sm:$0xf]
    %v70 = vld [vmem:[#allocation5 + $0x44] sm:$0xf]
    %v71 = vld [vmem:[#allocation5 + $0x48] sm:$0xf]
    %v72 = vld [vmem:[#allocation5 + $0x4c] sm:$0xf]
    %v73 = vld [vmem:[#allocation5 + $0x50] sm:$0xf]
    %v74 = vld [vmem:[#allocation5 + $0x54] sm:$0xf]
    %v75 = vld [vmem:[#allocation5 + $0x58] sm:$0xf]
    %v76 = vld [vmem:[#allocation5 + $0x5c] sm:$0xf]
    %v77 = vld [vmem:[#allocation5 + $0x60] sm:$0xf]
    %v78 = vld [vmem:[#allocation5 + $0x64] sm:$0xf]
    %v79 = vld [vmem:[#allocation5 + $0x68] sm:$0xf]
    %v80 = vld [vmem:[#allocation5 + $0x6c] sm:$0xf]
    %v81 = vld [vmem:[#allocation5 + $0x70] sm:$0xf]
    %v82 = vld [vmem:[#allocation5 + $0x74] sm:$0xf]
    %v83 = vld [vmem:[#allocation5 + $0x78] sm:$0xf]
    %v84 = vld [vmem:[#allocation5 + $0x7c] sm:$0xf]
    %v85 = vld [vmem:[%s2] sm:$0x1]
    %v87 = vperm.slane %v85, 0
    %v121 = vunpack.c.l.b16 %v53
    %v122 = vunpack.c.l.b16 %v54
    %v123 = vunpack.c.l.b16 %v55
    %v124 = vunpack.c.l.b16 %v56
    %v125 = vunpack.c.l.b16 %v57
    %v126 = vunpack.c.l.b16 %v58
    %v127 = vunpack.c.l.b16 %v59
    %v128 = vunpack.c.l.b16 %v60
    %v129 = vunpack.c.l.b16 %v61
    %v130 = vunpack.c.l.b16 %v62
    %v131 = vunpack.c.l.b16 %v63
    %v132 = vunpack.c.l.b16 %v64
    %v133 = vunpack.c.l.b16 %v65
    %v134 = vunpack.c.l.b16 %v66
    %v135 = vunpack.c.l.b16 %v67
    %v136 = vunpack.c.l.b16 %v68
    %v137 = vunpack.c.l.b16 %v69
    %v138 = vunpack.c.l.b16 %v70
    %v139 = vunpack.c.l.b16 %v71
    %v140 = vunpack.c.l.b16 %v72
    %v141 = vunpack.c.l.b16 %v73
    %v142 = vunpack.c.l.b16 %v74
    %v143 = vunpack.c.l.b16 %v75
    %v144 = vunpack.c.l.b16 %v76
    %v145 = vunpack.c.l.b16 %v77
    %v146 = vunpack.c.l.b16 %v78
    %v147 = vunpack.c.l.b16 %v79
    %v148 = vunpack.c.l.b16 %v80
    %v149 = vunpack.c.l.b16 %v81
    %v150 = vunpack.c.l.b16 %v82
    %v151 = vunpack.c.l.b16 %v83
    %v152 = vunpack.c.l.b16 %v84
    %v153 = vpack.c.b16 %v122, %v121
    %v154 = vpack.c.b16 %v124, %v123
    %v155 = vpack.c.b16 %v126, %v125
    %v156 = vpack.c.b16 %v128, %v127
    %v157 = vpack.c.b16 %v130, %v129
    %v158 = vpack.c.b16 %v132, %v131
    %v159 = vpack.c.b16 %v134, %v133
    %v160 = vpack.c.b16 %v136, %v135
    %v161 = vpack.c.b16 %v138, %v137
    %v162 = vpack.c.b16 %v140, %v139
    %v163 = vpack.c.b16 %v142, %v141
    %v164 = vpack.c.b16 %v144, %v143
    %v165 = vpack.c.b16 %v146, %v145
    %v166 = vpack.c.b16 %v148, %v147
    %v167 = vpack.c.b16 %v150, %v149
    %v168 = vpack.c.b16 %v152, %v151
    %185 = vmatpush.bf16.msra.mxu0 %v160
    %186 = vmatpush.bf16.msra.mxu0 %v159
    %187 = vmatpush.bf16.msra.mxu0 %v158
    %188 = vmatpush.bf16.msra.mxu0 %v157
    %189 = vmatpush.bf16.msra.mxu0 %v156
    %190 = vmatpush.bf16.msra.mxu0 %v155
    %191 = vmatpush.bf16.msra.mxu0 %v154
    %192 = vmatpush.bf16.msra.mxu0 %v153
    %193 = vmatmul.bf16.gmra.mxu0 %v51
    %v194 = vpop.f32.mrf.mxu0
    %v195 = vadd.f32 %v87, %v194
    %v196 = vpop.f32.mrf.mxu0
    %v197 = vadd.f32 %v87, %v196
    %198 = vdwg.mxu0
    %199 = vmatpush.bf16.msra.mxu0 %v168
    %200 = vmatpush.bf16.msra.mxu0 %v167
    %201 = vmatpush.bf16.msra.mxu0 %v166
    %202 = vmatpush.bf16.msra.mxu0 %v165
    %203 = vmatpush.bf16.msra.mxu0 %v164
    %204 = vmatpush.bf16.msra.mxu0 %v163
    %205 = vmatpush.bf16.msra.mxu0 %v162
    %206 = vmatpush.bf16.msra.mxu0 %v161
    %207 = vmatmul.bf16.gmra.mxu0 %v52
    %v208 = vpop.f32.mrf.mxu0
    %v209 = vadd.f32 %v195, %v208
    %v210 = vpop.f32.mrf.mxu0
    %v211 = vadd.f32 %v197, %v210
    %212 = vdwg.mxu0
    %213 = vst [vmem:[#allocation7] sm:$0xff] %v209
    %214 = vst [vmem:[#allocation7 + $0x8] sm:$0xff] %v211
    // Predicated region
    $region22: #{llm_resize_forward.1} parent=1 // pred_check
      _
    $region23: #{llm_resize_forward.1} parent=1 // pred_check_branch
      %216 = sbr.rel (0) target = $region25
    $region24: #{llm_resize_forward.1} parent=1 // pred_region
      %218 = vsyncadd [#allocation4], 0
      %s219 = sshll.u32 [#allocation7], 4
      %s220 = int_to_ptr.vmem [resolvable:$true] %s219
      %s221 = sshll.u32 %s3, 4
      %s222 = int_to_ptr.hbm [resolvable:$true] %s221
      %227 = dma.vmem_to_hbm [thread:$0]  %s220, 256, %s222, [#allocation4], 128, 128, 8
    $region25: #{llm_resize_forward.1} parent=1 // pred_fallthru
      _
    // Predicated region
    $region26: #{llm_resize_forward.1} parent=1 // pred_check
      _
    $region27: #{llm_resize_forward.1} parent=1 // pred_check_branch
      %229 = sbr.rel (0) target = $region29
    $region28: #{llm_resize_forward.1} parent=1 // pred_region
      %231 = dma.done [#allocation4], 256
    $region29: #{llm_resize_forward.1} parent=1 // pred_fallthru
      _
    %232 = vsyncpa [#allocation3], 1
    %233 = vsyncpa [#allocation6], 1
    %234 = vsyncpa [#allocation4], 1

</llo_original>
